<compile_context>
chip_gen: v7x
topology: tpu7x:2x2x1
jax: 0.10.0
libtpu: 0.0.40
codegen_flags: <defaults>
</compile_context>

<pallas_src>
import functools

import jax
import jax.numpy as jnp
from jax.experimental import pallas as pl
from jax.experimental.pallas import tpu as pltpu


def _round_up(x, m):
    return ((x + m - 1) // m) * m


def mlp_kernel(x_ref, w1_ref, b1_ref, w2_ref, b2_ref, w3_ref, b3_ref,
               o_ref, acc_ref, *, k_tile, k_valid, needs_k_mask):
    k = pl.program_id(1)

    @pl.when(k == 0)
    def _init():
        acc_ref[...] = jnp.zeros_like(acc_ref)

    x = x_ref[...]                                     # (b_tile, k_tile)
    if needs_k_mask:
        # Zero lanes past the true K on the ragged last tile (cheap VPU work,
        # hidden under the x DMA; no-op bound on the full tiles).
        cols = jax.lax.broadcasted_iota(jnp.int32, (1, x.shape[1]), 1)
        x = jnp.where(cols < (k_valid - k * k_tile), x, 0)
    x = x.astype(jnp.bfloat16)

    # fc1 partial product: bf16 operands, f32 accumulation on the MXU.
    # w1 is fully VMEM-resident; index the K slab for this grid step.
    acc_ref[...] += jnp.dot(x, w1_ref[k], preferred_element_type=jnp.float32)

    @pl.when(k == pl.num_programs(1) - 1)
    def _finish():
        h1 = jnp.maximum(acc_ref[...] + b1_ref[...], 0.0)
        h2 = jnp.dot(h1, w2_ref[...], preferred_element_type=jnp.float32)
        h2 = jnp.maximum(h2 + b2_ref[...], 0.0)
        out = jnp.dot(h2, w3_ref[...], preferred_element_type=jnp.float32)
        o_ref[...] = (out + b3_ref[...]).astype(o_ref.dtype)


@functools.partial(jax.jit, static_argnames=("b_tile", "k_tile"))
def mlp_forward(x, w1, b1, w2, b2, w3, b3, *, b_tile=None, k_tile=3840):
    B, K = x.shape
    hidden = w1.shape[1]
    num_classes = w3.shape[1]

    # Batch tile: multiple of 8; keep >= 2 batch tiles when possible so the
    # "parallel" axis gives both v7x TensorCores work.
    if b_tile is None:
        b_tile = 256
    half = _round_up(max(pl.cdiv(B, 2), 1), 8)
    b_tile = max(8, _round_up(min(b_tile, half), 8))
    if b_tile > B:
        b_tile = B          # single (full-extent) batch block
    nb = pl.cdiv(B, b_tile)

    # K tile: multiple of 128 lanes, capped at the rounded-up K extent.
    k_tile = _round_up(min(k_tile, _round_up(K, 128)), 128)
    nk = pl.cdiv(K, k_tile)
    K_pad = nk * k_tile

    # w1 is tiny (~1.5 MB bf16 at input_size=30000): cast + zero-pad along K
    # once, reshape to (nk, k_tile, hidden), keep fully VMEM-resident.
    w1_bf = w1.astype(jnp.bfloat16)
    if K_pad != K:
        w1_bf = jnp.pad(w1_bf, ((0, K_pad - K), (0, 0)))
    w1_bf = w1_bf.reshape(nk, k_tile, hidden)

    kernel = functools.partial(
        mlp_kernel, k_tile=k_tile, k_valid=K, needs_k_mask=(K % k_tile != 0))

    # Rough per-core VMEM footprint (lane dim padded to 128) -> scoped limit.
    lane = 128
    est = (2 * b_tile * k_tile * x.dtype.itemsize   # x, double-buffered
           + 2 * K_pad * lane * 2                   # resident w1 (worst case)
           + b_tile * lane * 4                      # f32 accumulator
           + 2 * b_tile * lane * 4                  # output blocks
           + (4 << 20))                             # small weights + slack
    vmem_limit = int(min(max(est, 16 << 20), 56 << 20))

    grid_spec = pltpu.PrefetchScalarGridSpec(
        num_scalar_prefetch=0,
        grid=(nb, nk),
        in_specs=[
            pl.BlockSpec((b_tile, k_tile), lambda b, k: (b, k)),         # x
            pl.BlockSpec((nk, k_tile, hidden), lambda b, k: (0, 0, 0)),  # w1
            pl.BlockSpec(b1.shape, lambda b, k: (0, 0)),                 # b1
            pl.BlockSpec(w2.shape, lambda b, k: (0, 0)),                 # w2
            pl.BlockSpec(b2.shape, lambda b, k: (0, 0)),                 # b2
            pl.BlockSpec(w3.shape, lambda b, k: (0, 0)),                 # w3
            pl.BlockSpec(b3.shape, lambda b, k: (0, 0)),                 # b3
        ],
        out_specs=pl.BlockSpec((b_tile, num_classes), lambda b, k: (b, 0)),
        scratch_shapes=[pltpu.VMEM((b_tile, hidden), jnp.float32)],
    )

    return pl.pallas_call(
        kernel,
        out_shape=jax.ShapeDtypeStruct((B, num_classes), jnp.float32),
        grid_spec=grid_spec,
        compiler_params=pltpu.CompilerParams(
            dimension_semantics=("parallel", "arbitrary"),
            vmem_limit_bytes=vmem_limit,
        ),
    )(x, w1_bf, b1, w2, b2, w3, b3)


def init_params(key, input_size, num_classes, hidden=25):
    # Deterministic synthetic init (mimics nn.Linear's uniform fan-in scaling).
    ks = jax.random.split(key, 6)

    def lin(kw, kb, fan_in, fan_out):
        bound = 1.0 / jnp.sqrt(fan_in)
        w = jax.random.uniform(kw, (fan_in, fan_out), jnp.float32, -bound, bound)
        b = jax.random.uniform(kb, (1, fan_out), jnp.float32, -bound, bound)
        return w, b

    w1, b1 = lin(ks[0], ks[1], input_size, hidden)
    w2, b2 = lin(ks[2], ks[3], hidden, hidden)
    w3, b3 = lin(ks[4], ks[5], hidden, num_classes)
    return w1, b1, w2, b2, w3, b3


if __name__ == "__main__":
    key = jax.random.PRNGKey(0)
    k_x, k_p = jax.random.split(key)

    # Small stand-ins for the real (input_size=30000) module; shapes exercise
    # multiple batch tiles, multiple K tiles, and ragged tails on both axes
    # (24 rows -> 16 + partial 8; K=300 -> two full 128-tiles + ragged 44).
    batch = 24
    input_size = 300
    num_classes = 13

    x = jax.random.normal(k_x, (batch, input_size), jnp.float32)
    params = init_params(k_p, input_size, num_classes)

    out = mlp_forward(x, *params, k_tile=128)
    out = jax.block_until_ready(out)

    # Reference in plain JAX at matching precision (x/w1 rounded to bf16 for
    # fc1 with f32 accumulation; fc2/fc3 in f32).
    w1, b1, w2, b2, w3, b3 = params
    x32 = x.astype(jnp.bfloat16).astype(jnp.float32)
    w132 = w1.astype(jnp.bfloat16).astype(jnp.float32)
    ref = jnp.maximum(x32 @ w132 + b1, 0.0)
    ref = jnp.maximum(ref @ w2 + b2, 0.0)
    ref = ref @ w3 + b3

    assert out.shape == (batch, num_classes)
    assert jnp.allclose(out, ref, atol=1e-3, rtol=1e-3), (
        float(jnp.max(jnp.abs(out - ref))))

    print("KERNEL_OK")
</pallas_src>

<mosaic_0001>
module attributes {stable_mosaic.version = 11 : i64} {
  func.func @mlp_kernel(%arg0: i32, %arg1: i32, %arg2: memref<16x128xf32, #tpu.memory_space<vmem>>, %arg3: memref<3x128x25xbf16, #tpu.memory_space<vmem>>, %arg4: memref<1x25xf32, #tpu.memory_space<vmem>>, %arg5: memref<25x25xf32, #tpu.memory_space<vmem>>, %arg6: memref<1x25xf32, #tpu.memory_space<vmem>>, %arg7: memref<25x13xf32, #tpu.memory_space<vmem>>, %arg8: memref<1x13xf32, #tpu.memory_space<vmem>>, %arg9: memref<16x13xf32, #tpu.memory_space<vmem>>, %arg10: memref<16x25xf32, #tpu.memory_space<vmem>>) attributes {dimension_semantics = [#tpu.dimension_semantics<parallel>, #tpu.dimension_semantics<arbitrary>], iteration_bounds = array<i64: 2, 3>, scalar_prefetch = 0 : i64, scratch_operands = 1 : i64, tpu.core_type = #tpu.core_type<tc>, window_params = [{transform_indices = @transform_0, window_bounds = array<i64: 16, 128>}, {pipeline_mode = #tpu.pipeline_mode<synchronous>, transform_indices = @transform_1, window_bounds = array<i64: 3, 128, 25>}, {pipeline_mode = #tpu.pipeline_mode<synchronous>, transform_indices = @transform_2, window_bounds = array<i64: 1, 25>}, {pipeline_mode = #tpu.pipeline_mode<synchronous>, transform_indices = @transform_3, window_bounds = array<i64: 25, 25>}, {pipeline_mode = #tpu.pipeline_mode<synchronous>, transform_indices = @transform_4, window_bounds = array<i64: 1, 25>}, {pipeline_mode = #tpu.pipeline_mode<synchronous>, transform_indices = @transform_5, window_bounds = array<i64: 25, 13>}, {pipeline_mode = #tpu.pipeline_mode<synchronous>, transform_indices = @transform_6, window_bounds = array<i64: 1, 13>}, {transform_indices = @transform_7, window_bounds = array<i64: 16, 13>}]} {
    %c0_i32 = arith.constant 0 : i32
    %0 = arith.cmpi eq, %arg1, %c0_i32 : i32
    %1 = arith.extui %0 : i1 to i32
    %c0_i32_0 = arith.constant 0 : i32
    %2 = arith.cmpi ne, %1, %c0_i32_0 : i32
    scf.if %2 {
      %cst_10 = arith.constant 0.000000e+00 : f32
      %25 = vector.broadcast %cst_10 : f32 to vector<16x25xf32>
      %c0_11 = arith.constant 0 : index
      %c0_12 = arith.constant 0 : index
      %26 = vector.load %arg10[%c0_11, %c0_12] : memref<16x25xf32, #tpu.memory_space<vmem>>, vector<16x25xf32>
      tpu.vector_store %arg10[%c0_11, %c0_12], %25 {strides = array<i32>} : memref<16x25xf32, #tpu.memory_space<vmem>>, vector<16x25xf32>,
    } else {
    }
    %c0 = arith.constant 0 : index
    %c0_1 = arith.constant 0 : index
    %3 = vector.load %arg2[%c0, %c0_1] : memref<16x128xf32, #tpu.memory_space<vmem>>, vector<16x128xf32>
    %4 = tpu.iota {dimensions = array<i32: 1>} : vector<1x128xi32>
    %c128_i32 = arith.constant 128 : i32
    %5 = arith.muli %arg1, %c128_i32 : i32
    %c300_i32 = arith.constant 300 : i32
    %6 = arith.subi %c300_i32, %5 : i32
    %7 = vector.broadcast %6 : i32 to vector<1x128xi32>
    %8 = arith.cmpi slt, %4, %7 : vector<1x128xi32>
    %c0_i32_2 = arith.constant 0 : i32
    %9 = arith.sitofp %c0_i32_2 : i32 to f32
    %10 = vector.shape_cast %8 : vector<1x128xi1> to vector<1x128xi1>
    %11 = vector.broadcast %10 : vector<1x128xi1> to vector<16x128xi1>
    %12 = vector.broadcast %9 : f32 to vector<16x128xf32>
    %13 = arith.select %11, %3, %12 : vector<16x128xi1>, vector<16x128xf32>
    %14 = arith.truncf %13 : vector<16x128xf32> to vector<16x128xbf16>
    %c0_3 = arith.constant 0 : index
    %c0_4 = arith.constant 0 : index
    %15 = vector.load %arg10[%c0_3, %c0_4] : memref<16x25xf32, #tpu.memory_space<vmem>>, vector<16x25xf32>
    %16 = arith.index_cast %arg1 : i32 to index
    %c0_5 = arith.constant 0 : index
    %c0_6 = arith.constant 0 : index
    %17 = vector.load %arg3[%16, %c0_5, %c0_6] : memref<3x128x25xbf16, #tpu.memory_space<vmem>>, vector<1x128x25xbf16>
    %18 = vector.shape_cast %17 : vector<1x128x25xbf16> to vector<128x25xbf16>
    %cst = arith.constant dense<0.000000e+00> : vector<16x25xf32>
    %19 = tpu.matmul %14, %18, %cst {dimension_numbers = #tpu.dot_dimension_numbers<[1], [0], [0], [1], [0, 0, 1, 1], [], []>} : vector<16x128xbf16>, vector<128x25xbf16>, vector<16x25xf32> -> vector<16x25xf32>
    %20 = arith.addf %15, %19 : vector<16x25xf32>
    %c0_7 = arith.constant 0 : index
    %c0_8 = arith.constant 0 : index
    %21 = vector.load %arg10[%c0_7, %c0_8] : memref<16x25xf32, #tpu.memory_space<vmem>>, vector<16x25xf32>
    tpu.vector_store %arg10[%c0_7, %c0_8], %20 {strides = array<i32>} : memref<16x25xf32, #tpu.memory_space<vmem>>, vector<16x25xf32>,
    %c2_i32 = arith.constant 2 : i32
    %22 = arith.cmpi eq, %arg1, %c2_i32 : i32
    %23 = arith.extui %22 : i1 to i32
    %c0_i32_9 = arith.constant 0 : i32
    %24 = arith.cmpi ne, %23, %c0_i32_9 : i32
    scf.if %24 {
      %c0_10 = arith.constant 0 : index
      %c0_11 = arith.constant 0 : index
      %25 = vector.load %arg10[%c0_10, %c0_11] : memref<16x25xf32, #tpu.memory_space<vmem>>, vector<16x25xf32>
      %c0_12 = arith.constant 0 : index
      %c0_13 = arith.constant 0 : index
      %26 = vector.load %arg4[%c0_12, %c0_13] : memref<1x25xf32, #tpu.memory_space<vmem>>, vector<1x25xf32>
      %27 = vector.broadcast %26 : vector<1x25xf32> to vector<16x25xf32>
      %28 = arith.addf %25, %27 : vector<16x25xf32>
      %cst_14 = arith.constant 0.000000e+00 : f32
      %29 = vector.broadcast %cst_14 : f32 to vector<16x25xf32>
      %30 = arith.maximumf %28, %29 : vector<16x25xf32>
      %c0_15 = arith.constant 0 : index
      %c0_16 = arith.constant 0 : index
      %31 = vector.load %arg5[%c0_15, %c0_16] : memref<25x25xf32, #tpu.memory_space<vmem>>, vector<25x25xf32>
      %cst_17 = arith.constant dense<0.000000e+00> : vector<16x25xf32>
      %32 = tpu.matmul %30, %31, %cst_17 {dimension_numbers = #tpu.dot_dimension_numbers<[1], [0], [0], [1], [0, 0, 1, 1], [], []>} : vector<16x25xf32>, vector<25x25xf32>, vector<16x25xf32> -> vector<16x25xf32>
      %c0_18 = arith.constant 0 : index
      %c0_19 = arith.constant 0 : index
      %33 = vector.load %arg6[%c0_18, %c0_19] : memref<1x25xf32, #tpu.memory_space<vmem>>, vector<1x25xf32>
      %34 = vector.broadcast %33 : vector<1x25xf32> to vector<16x25xf32>
      %35 = arith.addf %32, %34 : vector<16x25xf32>
      %cst_20 = arith.constant 0.000000e+00 : f32
      %36 = vector.broadcast %cst_20 : f32 to vector<16x25xf32>
      %37 = arith.maximumf %35, %36 : vector<16x25xf32>
      %c0_21 = arith.constant 0 : index
      %c0_22 = arith.constant 0 : index
      %38 = vector.load %arg7[%c0_21, %c0_22] : memref<25x13xf32, #tpu.memory_space<vmem>>, vector<25x13xf32>
      %cst_23 = arith.constant dense<0.000000e+00> : vector<16x13xf32>
      %39 = tpu.matmul %37, %38, %cst_23 {dimension_numbers = #tpu.dot_dimension_numbers<[1], [0], [0], [1], [0, 0, 1, 1], [], []>} : vector<16x25xf32>, vector<25x13xf32>, vector<16x13xf32> -> vector<16x13xf32>
      %c0_24 = arith.constant 0 : index
      %c0_25 = arith.constant 0 : index
      %40 = vector.load %arg8[%c0_24, %c0_25] : memref<1x13xf32, #tpu.memory_space<vmem>>, vector<1x13xf32>
      %41 = vector.broadcast %40 : vector<1x13xf32> to vector<16x13xf32>
      %42 = arith.addf %39, %41 : vector<16x13xf32>
      %c0_26 = arith.constant 0 : index
      %c0_27 = arith.constant 0 : index
      %43 = vector.load %arg9[%c0_26, %c0_27] : memref<16x13xf32, #tpu.memory_space<vmem>>, vector<16x13xf32>
      tpu.vector_store %arg9[%c0_26, %c0_27], %42 {strides = array<i32>} : memref<16x13xf32, #tpu.memory_space<vmem>>, vector<16x13xf32>,
    } else {
    }
    return
  }
  func.func @transform_0(%arg0: i32, %arg1: i32) -> (i32, i32) {
    %c0_i32 = arith.constant 0 : i32
    return %arg0, %arg1 : i32, i32
  }
  func.func @transform_1(%arg0: i32, %arg1: i32) -> (i32, i32, i32) {
    %c0_i32 = arith.constant 0 : i32
    %c0_i32_0 = arith.constant 0 : i32
    %c0_i32_1 = arith.constant 0 : i32
    %c0_i32_2 = arith.constant 0 : i32
    return %c0_i32, %c0_i32_0, %c0_i32_1 : i32, i32, i32
  }
  func.func @transform_2(%arg0: i32, %arg1: i32) -> (i32, i32) {
    %c0_i32 = arith.constant 0 : i32
    %c0_i32_0 = arith.constant 0 : i32
    %c0_i32_1 = arith.constant 0 : i32
    return %c0_i32, %c0_i32_0 : i32, i32
  }
  func.func @transform_3(%arg0: i32, %arg1: i32) -> (i32, i32) {
    %c0_i32 = arith.constant 0 : i32
    %c0_i32_0 = arith.constant 0 : i32
    %c0_i32_1 = arith.constant 0 : i32
    return %c0_i32, %c0_i32_0 : i32, i32
  }
  func.func @transform_4(%arg0: i32, %arg1: i32) -> (i32, i32) {
    %c0_i32 = arith.constant 0 : i32
    %c0_i32_0 = arith.constant 0 : i32
    %c0_i32_1 = arith.constant 0 : i32
    return %c0_i32, %c0_i32_0 : i32, i32
  }
  func.func @transform_5(%arg0: i32, %arg1: i32) -> (i32, i32) {
    %c0_i32 = arith.constant 0 : i32
    %c0_i32_0 = arith.constant 0 : i32
    %c0_i32_1 = arith.constant 0 : i32
    return %c0_i32, %c0_i32_0 : i32, i32
  }
  func.func @transform_6(%arg0: i32, %arg1: i32) -> (i32, i32) {
    %c0_i32 = arith.constant 0 : i32
    %c0_i32_0 = arith.constant 0 : i32
    %c0_i32_1 = arith.constant 0 : i32
    return %c0_i32, %c0_i32_0 : i32, i32
  }
  func.func @transform_7(%arg0: i32, %arg1: i32) -> (i32, i32) {
    %c0_i32 = arith.constant 0 : i32
    %c0_i32_0 = arith.constant 0 : i32
    return %arg0, %c0_i32 : i32, i32
  }
}

</mosaic_0001>

<llo_original>
// kernel: mlp_forward.1
$region0: #{mlp_forward.1}
  #allocation0 [shape = 'u32[]', space=smem, size = 0x4, offset = 0x4, fixed_abs, tag = 'smem constant byte address 0x4 - core index']
  #allocation1 [shape = 'u32[144,128]{1,0:T(1,128)}', space=vmem, size = 0x12000, scoped, tag = 'internal scratch']
  #allocation2 [shape = 'f32[16,25]{1,0:T(8,128)}', space=vmem, size = 0x2000, scoped, tag = 'scratch operand']
  %s0 = inlined_call_operand.vmem [shape: f32[24,300], index: 0, kind: input, shape index: {}]
  %s1 = inlined_call_operand.vmem [shape: bf16[3,128,25], index: 1, kind: input, shape index: {}]
  %s2 = inlined_call_operand.vmem [shape: f32[1,25], index: 2, kind: input, shape index: {}]
  %s3 = inlined_call_operand.vmem [shape: f32[25,25], index: 3, kind: input, shape index: {}]
  %s4 = inlined_call_operand.vmem [shape: f32[1,25], index: 4, kind: input, shape index: {}]
  %s5 = inlined_call_operand.vmem [shape: f32[25,13], index: 5, kind: input, shape index: {}]
  %s6 = inlined_call_operand.vmem [shape: f32[1,13], index: 6, kind: input, shape index: {}]
  %s7 = inlined_call_operand.vmem [shape: f32[24,13], index: 7, kind: output, shape index: {}]
  %s8 = sld [smem:[#allocation0]]
  $region169: #{mlp_forward.1} parent=0
    _
  %s10 = ssub.s32 1, %s8
  %s11 = scalar_select 0, %s10, %s8
  $region1: #{mlp_forward.1} parent=0
    #allocation3 [shape = 'u8[16384]{0}', space=vmem, size = 0x4000, scoped, tag = 'input window, operand 0']
    #allocation4 [shape = 'u8[16384]{0}', space=vmem, size = 0x4000, scoped, tag = 'output window, operand 0']
    loop: start=0, step=1, limit=8
    $region2: #{mlp_forward.1} parent=1 // loop_pre_header
      _
    $region3: #{mlp_forward.1} parent=1 // loop_header
      %s13 = sphi 0, %s17
      %p14 = scmp.ge.s32.totalorder %s13, 8
      %s20 = sphi 0, %s32
      %s21 = sphi 0, %s28
      %s22 = sphi 0, %s20
      %s23 = sphi 0, %s21
      %s24 = sphi 0, %s22
      %s25 = sphi 0, %s23
      %s37 = sphi 0, %s39
      %s40 = sphi 0, %s37
      %s41 = sphi 0, %s40
      %s57 = sphi 0, %s41
      %s61 = sphi 0, %s61
      %s63 = sphi 0, %s61
      %s64 = sphi 0, %s63
      %s78 = sphi 0, %s64
      %s82 = sphi 0, %s82
      %s84 = sphi 0, %s82
      %s85 = sphi 0, %s84
      %s99 = sphi 0, %s85
      %s103 = sphi 0, %s103
      %s105 = sphi 0, %s103
      %s106 = sphi 0, %s105
      %s120 = sphi 0, %s106
      %s124 = sphi 0, %s124
      %s126 = sphi 0, %s124
      %s127 = sphi 0, %s126
      %s141 = sphi 0, %s127
      %s145 = sphi 0, %s145
      %s147 = sphi 0, %s145
      %s148 = sphi 0, %s147
      %s162 = sphi 0, %s148
      %s166 = sphi 0, %s166
      %s168 = sphi 0, %s166
      %s169 = sphi 0, %s168
      %s183 = sphi 0, %s169
      %s189 = sphi 0, %s191
      %s192 = sphi 0, %s189
      %s193 = sphi 0, %s192
      %s209 = sphi 0, %s193
    $region4: #{mlp_forward.1} parent=1 // loop_header_branch
      %16 = sbr.rel (%p14) target = $region8
    $region5: #{mlp_forward.1} parent=1 // loop_body
      %s18 = ssub.s32 %s13, 1
      %s19 = ssub.s32 %s13, 2
      %s26 = sadd.s32 1, %s21
      %p27 = scmp.ge.s32.totalorder %s26, 3
      %s28 = scalar_select %p27, 0, %s26
      %s29 = sadd.s32 1, %s20
      %s30 = scalar_select %p27, %s29, %s20
      %p31 = scmp.ge.s32.totalorder %s30, 2
      %s32 = scalar_select %p31, 0, %s30
      %s33 = ssub.s32 %s20, %s32
      %s34 = ssub.s32 %s21, %s28
      %s35 = sor.u32 %s33, %s34
      %p36 = scmp.eq.s32.totalorder %s35, 0
      %s38 = sadd.s32 %s37, 1
      %s39 = scalar_select %p36, %s37, %s38
      %p42 = pneg %p36
      %p43 = scmp.eq.s32.totalorder %s13, 5
      %p44 = por %p42, %p43
      %p45 = scmp.ne.s32.totalorder %s37, %s40
      %p46 = scmp.eq.s32.totalorder %s13, 0
      %p47 = por %p45, %p46
      %p48 = scmp.ne.s32.totalorder %s37, %s40
      %p49 = scmp.eq.s32.totalorder %s18, 5
      %p50 = por %p48, %p49
      %p51 = scmp.ne.s32.totalorder %s40, %s41
      %p52 = scmp.eq.s32.totalorder %s18, 0
      %p53 = por %p51, %p52
      %p54 = scmp.ne.s32.totalorder %s40, %s41
      %p55 = scmp.eq.s32.totalorder %s19, 5
      %p56 = por %p54, %p55
      %p58 = scmp.ne.s32.totalorder %s41, %s57
      %p59 = scmp.eq.s32.totalorder %s19, 0
      %p60 = por %p58, %p59
      %s62 = sadd.s32 %s61, 1
      %p65 = scmp.eq.s32.totalorder %s13, 5
      %p66 = scmp.ne.s32.totalorder %s61, %s63
      %p67 = scmp.eq.s32.totalorder %s13, 0
      %p68 = por %p66, %p67
      %p69 = scmp.ne.s32.totalorder %s61, %s63
      %p70 = scmp.eq.s32.totalorder %s18, 5
      %p71 = por %p69, %p70
      %p72 = scmp.ne.s32.totalorder %s63, %s64
      %p73 = scmp.eq.s32.totalorder %s18, 0
      %p74 = por %p72, %p73
      %p75 = scmp.ne.s32.totalorder %s63, %s64
      %p76 = scmp.eq.s32.totalorder %s19, 5
      %p77 = por %p75, %p76
      %p79 = scmp.ne.s32.totalorder %s64, %s78
      %p80 = scmp.eq.s32.totalorder %s19, 0
      %p81 = por %p79, %p80
      %s83 = sadd.s32 %s82, 1
      %p86 = scmp.eq.s32.totalorder %s13, 5
      %p87 = scmp.ne.s32.totalorder %s82, %s84
      %p88 = scmp.eq.s32.totalorder %s13, 0
      %p89 = por %p87, %p88
      %p90 = scmp.ne.s32.totalorder %s82, %s84
      %p91 = scmp.eq.s32.totalorder %s18, 5
      %p92 = por %p90, %p91
      %p93 = scmp.ne.s32.totalorder %s84, %s85
      %p94 = scmp.eq.s32.totalorder %s18, 0
      %p95 = por %p93, %p94
      %p96 = scmp.ne.s32.totalorder %s84, %s85
      %p97 = scmp.eq.s32.totalorder %s19, 5
      %p98 = por %p96, %p97
      %p100 = scmp.ne.s32.totalorder %s85, %s99
      %p101 = scmp.eq.s32.totalorder %s19, 0
      %p102 = por %p100, %p101
      %s104 = sadd.s32 %s103, 1
      %p107 = scmp.eq.s32.totalorder %s13, 5
      %p108 = scmp.ne.s32.totalorder %s103, %s105
      %p109 = scmp.eq.s32.totalorder %s13, 0
      %p110 = por %p108, %p109
      %p111 = scmp.ne.s32.totalorder %s103, %s105
      %p112 = scmp.eq.s32.totalorder %s18, 5
      %p113 = por %p111, %p112
      %p114 = scmp.ne.s32.totalorder %s105, %s106
      %p115 = scmp.eq.s32.totalorder %s18, 0
      %p116 = por %p114, %p115
      %p117 = scmp.ne.s32.totalorder %s105, %s106
      %p118 = scmp.eq.s32.totalorder %s19, 5
      %p119 = por %p117, %p118
      %p121 = scmp.ne.s32.totalorder %s106, %s120
      %p122 = scmp.eq.s32.totalorder %s19, 0
      %p123 = por %p121, %p122
      %s125 = sadd.s32 %s124, 1
      %p128 = scmp.eq.s32.totalorder %s13, 5
      %p129 = scmp.ne.s32.totalorder %s124, %s126
      %p130 = scmp.eq.s32.totalorder %s13, 0
      %p131 = por %p129, %p130
      %p132 = scmp.ne.s32.totalorder %s124, %s126
      %p133 = scmp.eq.s32.totalorder %s18, 5
      %p134 = por %p132, %p133
      %p135 = scmp.ne.s32.totalorder %s126, %s127
      %p136 = scmp.eq.s32.totalorder %s18, 0
      %p137 = por %p135, %p136
      %p138 = scmp.ne.s32.totalorder %s126, %s127
      %p139 = scmp.eq.s32.totalorder %s19, 5
      %p140 = por %p138, %p139
      %p142 = scmp.ne.s32.totalorder %s127, %s141
      %p143 = scmp.eq.s32.totalorder %s19, 0
      %p144 = por %p142, %p143
      %s146 = sadd.s32 %s145, 1
      %p149 = scmp.eq.s32.totalorder %s13, 5
      %p150 = scmp.ne.s32.totalorder %s145, %s147
      %p151 = scmp.eq.s32.totalorder %s13, 0
      %p152 = por %p150, %p151
      %p153 = scmp.ne.s32.totalorder %s145, %s147
      %p154 = scmp.eq.s32.totalorder %s18, 5
      %p155 = por %p153, %p154
      %p156 = scmp.ne.s32.totalorder %s147, %s148
      %p157 = scmp.eq.s32.totalorder %s18, 0
      %p158 = por %p156, %p157
      %p159 = scmp.ne.s32.totalorder %s147, %s148
      %p160 = scmp.eq.s32.totalorder %s19, 5
      %p161 = por %p159, %p160
      %p163 = scmp.ne.s32.totalorder %s148, %s162
      %p164 = scmp.eq.s32.totalorder %s19, 0
      %p165 = por %p163, %p164
      %s167 = sadd.s32 %s166, 1
      %p170 = scmp.eq.s32.totalorder %s13, 5
      %p171 = scmp.ne.s32.totalorder %s166, %s168
      %p172 = scmp.eq.s32.totalorder %s13, 0
      %p173 = por %p171, %p172
      %p174 = scmp.ne.s32.totalorder %s166, %s168
      %p175 = scmp.eq.s32.totalorder %s18, 5
      %p176 = por %p174, %p175
      %p177 = scmp.ne.s32.totalorder %s168, %s169
      %p178 = scmp.eq.s32.totalorder %s18, 0
      %p179 = por %p177, %p178
      %p180 = scmp.ne.s32.totalorder %s168, %s169
      %p181 = scmp.eq.s32.totalorder %s19, 5
      %p182 = por %p180, %p181
      %p184 = scmp.ne.s32.totalorder %s169, %s183
      %p185 = scmp.eq.s32.totalorder %s19, 0
      %p186 = por %p184, %p185
      %s187 = ssub.s32 %s20, %s32
      %p188 = scmp.eq.s32.totalorder %s187, 0
      %s190 = sadd.s32 %s189, 1
      %s191 = scalar_select %p188, %s189, %s190
      %p194 = pneg %p188
      %p195 = scmp.eq.s32.totalorder %s13, 5
      %p196 = por %p194, %p195
      %p197 = scmp.ne.s32.totalorder %s189, %s192
      %p198 = scmp.eq.s32.totalorder %s13, 0
      %p199 = por %p197, %p198
      %p200 = scmp.ne.s32.totalorder %s189, %s192
      %p201 = scmp.eq.s32.totalorder %s18, 5
      %p202 = por %p200, %p201
      %p203 = scmp.ne.s32.totalorder %s192, %s193
      %p204 = scmp.eq.s32.totalorder %s18, 0
      %p205 = por %p203, %p204
      %p206 = scmp.ne.s32.totalorder %s192, %s193
      %p207 = scmp.eq.s32.totalorder %s19, 5
      %p208 = por %p206, %p207
      %p210 = scmp.ne.s32.totalorder %s193, %s209
      %p211 = scmp.eq.s32.totalorder %s19, 0
      %p212 = por %p210, %p211
      %p213 = scmp.le.s32.totalorder 1, %s13
      %p214 = scmp.lt.s32.totalorder %s13, 7
      %p215 = pnand %p213, %p214
      %p216 = pneg %p215
      // Predicated region
      $region9: #{mlp_forward.1} parent=5 // pred_check
        _
      $region10: #{mlp_forward.1} parent=5 // pred_check_branch
        %218 = sbr.rel (%p215) target = $region12
      $region11: #{mlp_forward.1} parent=5 // pred_region
        %s219 = ssub.s32 %s13, 1
        // Predicated region
        $region13: #{mlp_forward.1} parent=11 // pred_check
          %p220 = pneg %p74
        $region14: #{mlp_forward.1} parent=11 // pred_check_branch
          %222 = sbr.rel (%p220) target = $region16
        $region15: #{mlp_forward.1} parent=11 // pred_region
          _
        $region16: #{mlp_forward.1} parent=11 // pred_fallthru
          _
        // Predicated region
        $region17: #{mlp_forward.1} parent=11 // pred_check
          %p223 = pneg %p95
        $region18: #{mlp_forward.1} parent=11 // pred_check_branch
          %225 = sbr.rel (%p223) target = $region20
        $region19: #{mlp_forward.1} parent=11 // pred_region
          _
        $region20: #{mlp_forward.1} parent=11 // pred_fallthru
          _
        // Predicated region
        $region21: #{mlp_forward.1} parent=11 // pred_check
          %p226 = pneg %p116
        $region22: #{mlp_forward.1} parent=11 // pred_check_branch
          %228 = sbr.rel (%p226) target = $region24
        $region23: #{mlp_forward.1} parent=11 // pred_region
          _
        $region24: #{mlp_forward.1} parent=11 // pred_fallthru
          _
        // Predicated region
        $region25: #{mlp_forward.1} parent=11 // pred_check
          %p229 = pneg %p137
        $region26: #{mlp_forward.1} parent=11 // pred_check_branch
          %231 = sbr.rel (%p229) target = $region28
        $region27: #{mlp_forward.1} parent=11 // pred_region
          _
        $region28: #{mlp_forward.1} parent=11 // pred_fallthru
          _
        // Predicated region
        $region29: #{mlp_forward.1} parent=11 // pred_check
          %p232 = pneg %p158
        $region30: #{mlp_forward.1} parent=11 // pred_check_branch
          %234 = sbr.rel (%p232) target = $region32
        $region31: #{mlp_forward.1} parent=11 // pred_region
          _
        $region32: #{mlp_forward.1} parent=11 // pred_fallthru
          _
        // Predicated region
        $region33: #{mlp_forward.1} parent=11 // pred_check
          %p235 = pneg %p179
        $region34: #{mlp_forward.1} parent=11 // pred_check_branch
          %237 = sbr.rel (%p235) target = $region36
        $region35: #{mlp_forward.1} parent=11 // pred_region
          _
        $region36: #{mlp_forward.1} parent=11 // pred_fallthru
          _
      $region12: #{mlp_forward.1} parent=5 // pred_fallthru
        _
      %p238 = scmp.lt.s32.totalorder %s13, 6
      // Predicated region
      $region37: #{mlp_forward.1} parent=5 // pred_check
        %p239 = pneg %p238
      $region38: #{mlp_forward.1} parent=5 // pred_check_branch
        %241 = sbr.rel (%p239) target = $region40
      $region39: #{mlp_forward.1} parent=5 // pred_region
        // Predicated region
        $region41: #{mlp_forward.1} parent=39 // pred_check
          %p242 = pneg %p47
        $region42: #{mlp_forward.1} parent=39 // pred_check_branch
          %244 = sbr.rel (%p242) target = $region44
        $region43: #{mlp_forward.1} parent=39 // pred_region
          %s245 = sand.u32 %s37, 1
          %s246 = sand.u32 %s37, 1
          %s247 = smul.addr %s246, 16
          %s248 = scalar_lea.vmem [#allocation3], %s247
          %s249 = smul.u32 2, %s20
          %s250 = ssub.s32 3, %s249
          %p251 = scmp.lt.s32.totalorder %s250, 2
          %s252 = scalar_select %p251, %s250, 2
          %s253 = smul.u32 128, %s252
          %p254 = scmp.ne.s32.totalorder 0, %s253
          %s255 = smul.addr %s249, 3
          %s256 = sadd.s32 %s21, %s255
          %s257 = smul.addr %s256, 8
          %s258 = scalar_lea.vmem %s0, %s257
          // Predicated region
          $region45: #{mlp_forward.1} parent=43 // pred_check
            %p259 = pneg %p254
          $region46: #{mlp_forward.1} parent=43 // pred_check_branch
            %261 = sbr.rel (%p259) target = $region48
          $region47: #{mlp_forward.1} parent=43 // pred_region
            // Predicated region
            $region49: #{mlp_forward.1} parent=47 // pred_check
              _
            $region50: #{mlp_forward.1} parent=47 // pred_check_branch
              %263 = sbr.rel (0) target = $region52
            $region51: #{mlp_forward.1} parent=47 // pred_region
              // Predicated region
              $region71: #{mlp_forward.1} parent=51 // pred_check
                _
              $region72: #{mlp_forward.1} parent=51 // pred_check_branch
                %314 = sbr.rel (0) target = $region74
              $region73: #{mlp_forward.1} parent=51 // pred_region
                %s315 = sshrl.u32 %s252, 1
                // While loop
                $region75: #{mlp_forward.1} parent=73 // loop_pre_header
                  _
                $region76: #{mlp_forward.1} parent=73 // loop_header
                  %s317 = sphi 0, %s319
                  %p318 = scmp.ge.s32.totalorder %s317, %s315
                  %s322 = sphi 0, %s331
                  %s323 = sphi %s258, %s334
                  %s324 = sphi %s248, %s335
                $region77: #{mlp_forward.1} parent=73 // loop_header_branch
                  %321 = sbr.rel (%p318) target = $region81
                $region78: #{mlp_forward.1} parent=73 // loop_body
                  %v325 = vld [vmem:[%s323] sm:$0xff]
                  %326 = vst [vmem:[%s324] sm:$0xff] %v325
                  %v327 = vld [vmem:[%s323 + $0x18] sm:$0xff]
                  %328 = vst [vmem:[%s324 + $0x8] sm:$0xff] %v327
                  %s329 = sadd.s32 1, %s322
                  %p330 = scmp.ge.s32.totalorder %s329, %s315
                  %s331 = scalar_select %p330, 0, %s329
                  %s332 = smul.u32 %s331, 48
                  %s333 = smul.u32 %s331, 16
                  %s334 = scalar_lea.vmem %s258, %s332
                  %s335 = scalar_lea.vmem %s248, %s333 [#allocation3]
                $region79: #{mlp_forward.1} parent=73 // loop_footer
                  %s319 = sadd.s32 %s317, 1
                $region80: #{mlp_forward.1} parent=73 // loop_footer_branch
                  %316 = sbr.rel target = $region76
                $region81: #{mlp_forward.1} parent=73 // loop_exit
                  _
                %s336 = sshrl.u32 %s252, 1
                %s337 = sand.u32 %s252, 1
                %s338 = smul.u32 %s336, 2
                %s339 = smul.u32 24, %s338
                %s340 = scalar_lea.vmem %s258, %s339
                %s341 = smul.u32 8, %s338
                %s342 = scalar_lea.vmem %s248, %s341 [#allocation3]
                // While loop
                $region82: #{mlp_forward.1} parent=73 // loop_pre_header
                  _
                $region83: #{mlp_forward.1} parent=73 // loop_header
                  %s344 = sphi 0, %s346
                  %p345 = scmp.ge.s32.totalorder %s344, %s337
                  %s349 = sphi 0, %s356
                  %s350 = sphi %s340, %s359
                  %s351 = sphi %s342, %s360
                $region84: #{mlp_forward.1} parent=73 // loop_header_branch
                  %348 = sbr.rel (%p345) target = $region88
                $region85: #{mlp_forward.1} parent=73 // loop_body
                  %v352 = vld [vmem:[%s350] sm:$0xff]
                  %353 = vst [vmem:[%s351] sm:$0xff] %v352
                  %s354 = sadd.s32 1, %s349
                  %p355 = scmp.ge.s32.totalorder %s354, %s337
                  %s356 = scalar_select %p355, 0, %s354
                  %s357 = smul.u32 %s356, 24
                  %s358 = smul.u32 %s356, 8
                  %s359 = scalar_lea.vmem %s340, %s357
                  %s360 = scalar_lea.vmem %s342, %s358 [#allocation3]
                $region86: #{mlp_forward.1} parent=73 // loop_footer
                  %s346 = sadd.s32 %s344, 1
                $region87: #{mlp_forward.1} parent=73 // loop_footer_branch
                  %343 = sbr.rel target = $region83
                $region88: #{mlp_forward.1} parent=73 // loop_exit
                  _
              $region74: #{mlp_forward.1} parent=51 // pred_fallthru
                _
              // Predicated region
              $region89: #{mlp_forward.1} parent=51 // pred_check
                _
              $region90: #{mlp_forward.1} parent=51 // pred_check_branch
                %362 = sbr.rel target = $region92
              $region91: #{mlp_forward.1} parent=51 // pred_region
                _
              $region92: #{mlp_forward.1} parent=51 // pred_fallthru
                _
            $region52: #{mlp_forward.1} parent=47 // pred_fallthru
              _
            // Predicated region
            $region53: #{mlp_forward.1} parent=47 // pred_check
              _
            $region54: #{mlp_forward.1} parent=47 // pred_check_branch
              %265 = sbr.rel target = $region56
            $region55: #{mlp_forward.1} parent=47 // pred_region
              %s267 = sshrl.u32 %s252, 1
              // While loop
              $region57: #{mlp_forward.1} parent=55 // loop_pre_header
                _
              $region58: #{mlp_forward.1} parent=55 // loop_header
                %s269 = sphi 0, %s271
                %p270 = scmp.ge.s32.totalorder %s269, %s267
                %s274 = sphi 0, %s283
                %s275 = sphi %s258, %s286
                %s276 = sphi %s248, %s287
              $region59: #{mlp_forward.1} parent=55 // loop_header_branch
                %273 = sbr.rel (%p270) target = $region63
              $region60: #{mlp_forward.1} parent=55 // loop_body
                %v277 = vld [vmem:[%s275] sm:$0xff]
                %278 = vst [vmem:[%s276] sm:$0xff] %v277
                %v279 = vld [vmem:[%s275 + $0x18] sm:$0xff]
                %280 = vst [vmem:[%s276 + $0x8] sm:$0xff] %v279
                %s281 = sadd.s32 1, %s274
                %p282 = scmp.ge.s32.totalorder %s281, %s267
                %s283 = scalar_select %p282, 0, %s281
                %s284 = smul.u32 %s283, 48
                %s285 = smul.u32 %s283, 16
                %s286 = scalar_lea.vmem %s258, %s284
                %s287 = scalar_lea.vmem %s248, %s285 [#allocation3]
              $region61: #{mlp_forward.1} parent=55 // loop_footer
                %s271 = sadd.s32 %s269, 1
              $region62: #{mlp_forward.1} parent=55 // loop_footer_branch
                %268 = sbr.rel target = $region58
              $region63: #{mlp_forward.1} parent=55 // loop_exit
                _
              %s288 = sshrl.u32 %s252, 1
              %s289 = sand.u32 %s252, 1
              %s290 = smul.u32 %s288, 2
              %s291 = smul.u32 24, %s290
              %s292 = scalar_lea.vmem %s258, %s291
              %s293 = smul.u32 8, %s290
              %s294 = scalar_lea.vmem %s248, %s293 [#allocation3]
              // While loop
              $region64: #{mlp_forward.1} parent=55 // loop_pre_header
                _
              $region65: #{mlp_forward.1} parent=55 // loop_header
                %s296 = sphi 0, %s298
                %p297 = scmp.ge.s32.totalorder %s296, %s289
                %s301 = sphi 0, %s308
                %s302 = sphi %s292, %s311
                %s303 = sphi %s294, %s312
              $region66: #{mlp_forward.1} parent=55 // loop_header_branch
                %300 = sbr.rel (%p297) target = $region70
              $region67: #{mlp_forward.1} parent=55 // loop_body
                %v304 = vld [vmem:[%s302] sm:$0xff]
                %305 = vst [vmem:[%s303] sm:$0xff] %v304
                %s306 = sadd.s32 1, %s301
                %p307 = scmp.ge.s32.totalorder %s306, %s289
                %s308 = scalar_select %p307, 0, %s306
                %s309 = smul.u32 %s308, 24
                %s310 = smul.u32 %s308, 8
                %s311 = scalar_lea.vmem %s292, %s309
                %s312 = scalar_lea.vmem %s294, %s310 [#allocation3]
              $region68: #{mlp_forward.1} parent=55 // loop_footer
                %s298 = sadd.s32 %s296, 1
              $region69: #{mlp_forward.1} parent=55 // loop_footer_branch
                %295 = sbr.rel target = $region65
              $region70: #{mlp_forward.1} parent=55 // loop_exit
                _
            $region56: #{mlp_forward.1} parent=47 // pred_fallthru
              _
          $region48: #{mlp_forward.1} parent=43 // pred_fallthru
            _
          %363 = vnop
        $region44: #{mlp_forward.1} parent=39 // pred_fallthru
          _
      $region40: #{mlp_forward.1} parent=5 // pred_fallthru
        _
      %p364 = scmp.le.s32.totalorder 1, %s13
      %p365 = scmp.lt.s32.totalorder %s13, 7
      %p366 = pnand %p364, %p365
      %p367 = pneg %p366
      // Predicated region
      $region93: #{mlp_forward.1} parent=5 // pred_check
        _
      $region94: #{mlp_forward.1} parent=5 // pred_check_branch
        %369 = sbr.rel (%p366) target = $region96
      $region95: #{mlp_forward.1} parent=5 // pred_region
        %s370 = ssub.s32 %s13, 1
        %s371 = sand.u32 %s40, 1
        %s372 = sand.u32 %s40, 1
        %s373 = smul.addr %s372, 16
        %s374 = scalar_lea.vmem [#allocation3], %s373
        // Predicated region
        $region97: #{mlp_forward.1} parent=95 // pred_check
          %p375 = pneg %p53
        $region98: #{mlp_forward.1} parent=95 // pred_check_branch
          %377 = sbr.rel (%p375) target = $region100
        $region99: #{mlp_forward.1} parent=95 // pred_region
          _
        $region100: #{mlp_forward.1} parent=95 // pred_fallthru
          _
        %s378 = sand.u32 %s40, 1
        %s379 = sand.u32 %s40, 1
        %s380 = smul.addr %s379, 16
        %s381 = scalar_lea.vmem [#allocation3], %s380
        %p382 = pneg %p53
        %p383 = pneg %p50
        %p384 = pneg %p74
        %p385 = pneg %p71
        %p386 = pneg %p95
        %p387 = pneg %p92
        %p388 = pneg %p116
        %p389 = pneg %p113
        %p390 = pneg %p137
        %p391 = pneg %p134
        %p392 = pneg %p158
        %p393 = pneg %p155
        %p394 = pneg %p179
        %p395 = pneg %p176
        %p396 = pneg %p205
        %p397 = pneg %p202
        %s398 = sand.u32 %s192, 1
        %s399 = sand.u32 %s192, 1
        %s400 = smul.addr %s399, 16
        %s401 = scalar_lea.vmem [#allocation4], %s400
        %s402 = smul.u32 2, %s22
        %s403 = ssub.s32 3, %s402
        %p404 = scmp.lt.s32.totalorder %s403, 2
        %s405 = scalar_select %p404, %s403, 2
        %s406 = smul.u32 128, %s405
        %s407 = smul.u32 2, %s22
        %s408 = ssub.s32 3, %s407
        %p409 = scmp.lt.s32.totalorder %s408, 2
        %s410 = scalar_select %p409, %s408, 2
        %s411 = smul.u32 128, %s410
        %p413 = scmp.eq.s32.totalorder %s23, 0
        // Predicated region
        $region101: #{mlp_forward.1} parent=95 // pred_check
          %p414 = pneg %p413
        $region102: #{mlp_forward.1} parent=95 // pred_check_branch
          %416 = sbr.rel (%p414) target = $region104
        $region103: #{mlp_forward.1} parent=95 // pred_region
          %vm417 = vcmask 203776
          %418 = vst.msk [vmem:[#allocation2] sm:$0xff] %vm417, 0.0
          %419 = vst.msk [vmem:[#allocation2 + $0x8] sm:$0xff] %vm417, 0.0
        $region104: #{mlp_forward.1} parent=95 // pred_fallthru
          _
        %v420 = vld [vmem:[%s374] sm:$0xff]
        %v421 = vld [vmem:[%s374 + $0x8] sm:$0xff]
        %v422 = vlaneseq
        %v423 = vand.u32 %v422, 127
        %s424 = smul.u32 %s23, 128
        %s425 = ssub.s32 300, %s424
        %v426 = vstv %s425
        %vm427 = vcmp.lt.s32.totalorder %v423, %v426
        %v428 = vsel %vm427, 1, 0
        %vm429 = vcmp.eq.s32.totalorder %v428, 1
        %v430 = vsel %vm429, %v420, 0.0
        %v431 = vsel %vm429, %v421, 0.0
        %v432 = vpack.c.bf16 %v431, %v430
        %v433 = vld [vmem:[#allocation2] sm:$0xff]
        %v434 = vld [vmem:[#allocation2 + $0x8] sm:$0xff]
        %s435 = smul.u32 %s23, 16
        %s436 = smul.addr %s435, 4
        %s437 = scalar_lea.vmem %s1, %s436
        %v438 = vld [vmem:[%s437] sm:$0xf]
        %v439 = vld [vmem:[%s437 + $0x4] sm:$0xf]
        %v440 = vld [vmem:[%s437 + $0x8] sm:$0xf]
        %v441 = vld [vmem:[%s437 + $0xc] sm:$0xf]
        %v442 = vld [vmem:[%s437 + $0x10] sm:$0xf]
        %v443 = vld [vmem:[%s437 + $0x14] sm:$0xf]
        %v444 = vld [vmem:[%s437 + $0x18] sm:$0xf]
        %v445 = vld [vmem:[%s437 + $0x1c] sm:$0xf]
        %v446 = vld [vmem:[%s437 + $0x20] sm:$0xf]
        %v447 = vld [vmem:[%s437 + $0x24] sm:$0xf]
        %v448 = vld [vmem:[%s437 + $0x28] sm:$0xf]
        %v449 = vld [vmem:[%s437 + $0x2c] sm:$0xf]
        %v450 = vld [vmem:[%s437 + $0x30] sm:$0xf]
        %v451 = vld [vmem:[%s437 + $0x34] sm:$0xf]
        %v452 = vld [vmem:[%s437 + $0x38] sm:$0xf]
        %v453 = vld [vmem:[%s437 + $0x3c] sm:$0xf]
        %v470 = vunpack.c.l.b16 %v438
        %v471 = vunpack.c.l.b16 %v439
        %v472 = vunpack.c.l.b16 %v440
        %v473 = vunpack.c.l.b16 %v441
        %v474 = vunpack.c.l.b16 %v442
        %v475 = vunpack.c.l.b16 %v443
        %v476 = vunpack.c.l.b16 %v444
        %v477 = vunpack.c.l.b16 %v445
        %v478 = vunpack.c.l.b16 %v446
        %v479 = vunpack.c.l.b16 %v447
        %v480 = vunpack.c.l.b16 %v448
        %v481 = vunpack.c.l.b16 %v449
        %v482 = vunpack.c.l.b16 %v450
        %v483 = vunpack.c.l.b16 %v451
        %v484 = vunpack.c.l.b16 %v452
        %v485 = vunpack.c.l.b16 %v453
        %v486 = vpack.c.b16 %v471, %v470
        %v487 = vpack.c.b16 %v473, %v472
        %v488 = vpack.c.b16 %v475, %v474
        %v489 = vpack.c.b16 %v477, %v476
        %v490 = vpack.c.b16 %v479, %v478
        %v491 = vpack.c.b16 %v481, %v480
        %v492 = vpack.c.b16 %v483, %v482
        %v493 = vpack.c.b16 %v485, %v484
        %502 = vmatprep.subr.bf16.mxu0 0
        %503 = vmatpush1.bf16.msra.mxu0 %v486
        %504 = vmatprep.subr.bf16.mxu0 0
        %505 = vmatpush1.bf16.msra.mxu0 %v487
        %506 = vmatprep.subr.bf16.mxu0 0
        %507 = vmatpush1.bf16.msra.mxu0 %v488
        %508 = vmatprep.subr.bf16.mxu0 0
        %509 = vmatpush1.bf16.msra.mxu0 %v489
        %510 = vmatprep.subr.bf16.mxu0 0
        %511 = vmatpush1.bf16.msra.mxu0 %v490
        %512 = vmatprep.subr.bf16.mxu0 0
        %513 = vmatpush1.bf16.msra.mxu0 %v491
        %514 = vmatprep.subr.bf16.mxu0 0
        %515 = vmatpush1.bf16.msra.mxu0 %v492
        %516 = vmatprep.subr.bf16.mxu0 0
        %517 = vmatpush1.bf16.msra.mxu0 %v493
        %518 = vmatprep.subr.bf16.mxu0 0
        %519 = vmatpush1.bf16.msra.mxu0 0
        %520 = vmatprep.subr.bf16.mxu0 0
        %521 = vmatpush1.bf16.msra.mxu0 0
        %522 = vmatprep.subr.bf16.mxu0 0
        %523 = vmatpush1.bf16.msra.mxu0 0
        %524 = vmatprep.subr.bf16.mxu0 0
        %525 = vmatpush1.bf16.msra.mxu0 0
        %526 = vmatprep.subr.bf16.mxu0 0
        %527 = vmatpush1.bf16.msra.mxu0 0
        %528 = vmatprep.subr.bf16.mxu0 0
        %529 = vmatpush1.bf16.msra.mxu0 0
        %530 = vmatprep.subr.bf16.mxu0 0
        %531 = vmatpush1.bf16.msra.mxu0 0
        %532 = vmatprep.subr.bf16.mxu0 0
        %533 = vmatpush1.bf16.msra.mxu0 0
        %534 = vmatprep.mubr.bf16.mxu0 0
        %535 = vmatmul.mubr.bf16.gmra.mrb[0].mxu0 %v432
        %v536 = vpop.f32.mrb[0].mxu0
        %v537 = vadd.f32 0.0, %v536
        %v538 = vpop.f32.mrb[0].mxu0
        %v539 = vpop.f32.mrb[0].mxu0
        %v540 = vadd.f32 0.0, %v539
        %v541 = vpop.f32.mrb[0].mxu0
        %542 = vdwg.mxu0
        %v543 = vadd.f32 %v433, %v537
        %v544 = vadd.f32 %v434, %v540
        %vm545 = vcmask 203776
        %546 = vst.msk [vmem:[#allocation2] sm:$0xff] %vm545, %v543
        %547 = vst.msk [vmem:[#allocation2 + $0x8] sm:$0xff] %vm545, %v544
        %p548 = scmp.eq.s32.totalorder %s23, 2
        // Predicated region
        $region105: #{mlp_forward.1} parent=95 // pred_check
          %p549 = pneg %p548
        $region106: #{mlp_forward.1} parent=95 // pred_check_branch
          %551 = sbr.rel (%p549) target = $region108
        $region107: #{mlp_forward.1} parent=95 // pred_region
          %v552 = vld [vmem:[#allocation2] sm:$0xff]
          %v553 = vld [vmem:[#allocation2 + $0x8] sm:$0xff]
          %v554 = vld [vmem:[%s2] sm:$0x1]
          %v556 = vlaneseq
          %v557 = vshrl.u32 %v556, 7
          %v558 = vsub.s32 0, %v557
          %v559 = vrot.slane %v554, %v558
          %v561 = vadd.f32 %v552, %v559
          %v562 = vadd.f32 %v553, %v559
          %v563 = vmax.f32 %v561, 0.0
          %v564 = vmax.f32 %v562, 0.0
          %v565 = vld [vmem:[%s3] sm:$0xff]
          %v566 = vld [vmem:[%s3 + $0x8] sm:$0xff]
          %v567 = vld [vmem:[%s3 + $0x10] sm:$0xff]
          %v568 = vld [vmem:[%s3 + $0x18] sm:$0x1]
          %v569 = vld [vmem:[%s4] sm:$0x1]
          %v571 = vlaneseq
          %v572 = vshrl.u32 %v571, 7
          %v573 = vsub.s32 0, %v572
          %v574 = vrot.slane %v569, %v573
          %v577 = vsel %vm545, %v563, 0
          %v580 = vsel %vm545, %v564, 0
          %vm582 = vcmask 1040384
          %v584 = vsel %vm582, %v568, 0
          %586 = vmatprep.subr.mxu0 0.0
          %587 = vmatpush1.msra.mxu0 %v565
          %588 = vmatprep.subr.mxu0 0.0
          %589 = vmatpush1.msra.mxu0 %v566
          %590 = vmatprep.subr.mxu0 0.0
          %591 = vmatpush1.msra.mxu0 %v567
          %592 = vmatprep.subr.mxu0 0.0
          %593 = vmatpush1.msra.mxu0 %v584
          %594 = vmatprep.subr.mxu0 0.0
          %595 = vmatpush1.msra.mxu0 0.0
          %596 = vmatprep.subr.mxu0 0.0
          %597 = vmatpush1.msra.mxu0 0.0
          %598 = vmatprep.subr.mxu0 0.0
          %599 = vmatpush1.msra.mxu0 0.0
          %600 = vmatprep.subr.mxu0 0.0
          %601 = vmatpush1.msra.mxu0 0.0
          %602 = vmatprep.subr.mxu0 0.0
          %603 = vmatpush1.msra.mxu0 0.0
          %604 = vmatprep.subr.mxu0 0.0
          %605 = vmatpush1.msra.mxu0 0.0
          %606 = vmatprep.subr.mxu0 0.0
          %607 = vmatpush1.msra.mxu0 0.0
          %608 = vmatprep.subr.mxu0 0.0
          %609 = vmatpush1.msra.mxu0 0.0
          %610 = vmatprep.subr.mxu0 0.0
          %611 = vmatpush1.msra.mxu0 0.0
          %612 = vmatprep.subr.mxu0 0.0
          %613 = vmatpush1.msra.mxu0 0.0
          %614 = vmatprep.subr.mxu0 0.0
          %615 = vmatpush1.msra.mxu0 0.0
          %616 = vmatprep.subr.mxu0 0.0
          %617 = vmatpush1.msra.mxu0 0.0
          %618 = vmatprep.subr.mxu0 0.0
          %619 = vmatpush1.msra.mxu0 0.0
          %620 = vmatprep.subr.mxu0 0.0
          %621 = vmatpush1.msra.mxu0 0.0
          %622 = vmatprep.subr.mxu0 0.0
          %623 = vmatpush1.msra.mxu0 0.0
          %624 = vmatprep.subr.mxu0 0.0
          %625 = vmatpush1.msra.mxu0 0.0
          %626 = vmatprep.subr.mxu0 0.0
          %627 = vmatpush1.msra.mxu0 0.0
          %628 = vmatprep.subr.mxu0 0.0
          %629 = vmatpush1.msra.mxu0 0.0
          %630 = vmatprep.subr.mxu0 0.0
          %631 = vmatpush1.msra.mxu0 0.0
          %632 = vmatprep.subr.mxu0 0.0
          %633 = vmatpush1.msra.mxu0 0.0
          %634 = vmatprep.subr.mxu0 0.0
          %635 = vmatpush1.msra.mxu0 0.0
          %636 = vmatprep.subr.mxu0 0.0
          %637 = vmatpush1.msra.mxu0 0.0
          %638 = vmatprep.subr.mxu0 0.0
          %639 = vmatpush1.msra.mxu0 0.0
          %640 = vmatprep.subr.mxu0 0.0
          %641 = vmatpush1.msra.mxu0 0.0
          %642 = vmatprep.subr.mxu0 0.0
          %643 = vmatpush1.msra.mxu0 0.0
          %644 = vmatprep.subr.mxu0 0.0
          %645 = vmatpush1.msra.mxu0 0.0
          %646 = vmatprep.subr.mxu0 0.0
          %647 = vmatpush1.msra.mxu0 0.0
          %648 = vmatprep.subr.mxu0 0.0
          %649 = vmatpush1.msra.mxu0 0.0
          %650 = vmatprep.mubr.f32.mxu0 0.0
          %651 = vmatmul.mubr.f32.gmra.mrb[0].mxu0 %v577
          %v652 = vpop.f32.mrb[0].mxu0
          %v653 = vadd.f32 %v574, %v652
          %v654 = vpop.f32.mrb[0].mxu0
          %655 = vmatprep.mubr.f32.mxu0 0.0
          %656 = vmatmul.mubr.f32.gmra.mrb[0].mxu0 %v580
          %v657 = vpop.f32.mrb[0].mxu0
          %v658 = vadd.f32 %v574, %v657
          %v659 = vpop.f32.mrb[0].mxu0
          %660 = vdwg.mxu0
          %v661 = vmax.f32 %v653, 0.0
          %v662 = vmax.f32 %v658, 0.0
          %v663 = vld [vmem:[%s5] sm:$0xff]
          %v664 = vld [vmem:[%s5 + $0x8] sm:$0xff]
          %v665 = vld [vmem:[%s5 + $0x10] sm:$0xff]
          %v666 = vld [vmem:[%s5 + $0x18] sm:$0x1]
          %v667 = vld [vmem:[%s6] sm:$0x1]
          %v669 = vlaneseq
          %v670 = vshrl.u32 %v669, 7
          %v671 = vsub.s32 0, %v670
          %v672 = vrot.slane %v667, %v671
          %v675 = vsel %vm545, %v661, 0
          %v678 = vsel %vm545, %v662, 0
          %v681 = vsel %vm582, %v666, 0
          %683 = vmatprep.subr.mxu0 0.0
          %684 = vmatpush1.msra.mxu0 %v663
          %685 = vmatprep.subr.mxu0 0.0
          %686 = vmatpush1.msra.mxu0 %v664
          %687 = vmatprep.subr.mxu0 0.0
          %688 = vmatpush1.msra.mxu0 %v665
          %689 = vmatprep.subr.mxu0 0.0
          %690 = vmatpush1.msra.mxu0 %v681
          %691 = vmatprep.subr.mxu0 0.0
          %692 = vmatpush1.msra.mxu0 0.0
          %693 = vmatprep.subr.mxu0 0.0
          %694 = vmatpush1.msra.mxu0 0.0
          %695 = vmatprep.subr.mxu0 0.0
          %696 = vmatpush1.msra.mxu0 0.0
          %697 = vmatprep.subr.mxu0 0.0
          %698 = vmatpush1.msra.mxu0 0.0
          %699 = vmatprep.subr.mxu0 0.0
          %700 = vmatpush1.msra.mxu0 0.0
          %701 = vmatprep.subr.mxu0 0.0
          %702 = vmatpush1.msra.mxu0 0.0
          %703 = vmatprep.subr.mxu0 0.0
          %704 = vmatpush1.msra.mxu0 0.0
          %705 = vmatprep.subr.mxu0 0.0
          %706 = vmatpush1.msra.mxu0 0.0
          %707 = vmatprep.subr.mxu0 0.0
          %708 = vmatpush1.msra.mxu0 0.0
          %709 = vmatprep.subr.mxu0 0.0
          %710 = vmatpush1.msra.mxu0 0.0
          %711 = vmatprep.subr.mxu0 0.0
          %712 = vmatpush1.msra.mxu0 0.0
          %713 = vmatprep.subr.mxu0 0.0
          %714 = vmatpush1.msra.mxu0 0.0
          %715 = vmatprep.subr.mxu0 0.0
          %716 = vmatpush1.msra.mxu0 0.0
          %717 = vmatprep.subr.mxu0 0.0
          %718 = vmatpush1.msra.mxu0 0.0
          %719 = vmatprep.subr.mxu0 0.0
          %720 = vmatpush1.msra.mxu0 0.0
          %721 = vmatprep.subr.mxu0 0.0
          %722 = vmatpush1.msra.mxu0 0.0
          %723 = vmatprep.subr.mxu0 0.0
          %724 = vmatpush1.msra.mxu0 0.0
          %725 = vmatprep.subr.mxu0 0.0
          %726 = vmatpush1.msra.mxu0 0.0
          %727 = vmatprep.subr.mxu0 0.0
          %728 = vmatpush1.msra.mxu0 0.0
          %729 = vmatprep.subr.mxu0 0.0
          %730 = vmatpush1.msra.mxu0 0.0
          %731 = vmatprep.subr.mxu0 0.0
          %732 = vmatpush1.msra.mxu0 0.0
          %733 = vmatprep.subr.mxu0 0.0
          %734 = vmatpush1.msra.mxu0 0.0
          %735 = vmatprep.subr.mxu0 0.0
          %736 = vmatpush1.msra.mxu0 0.0
          %737 = vmatprep.subr.mxu0 0.0
          %738 = vmatpush1.msra.mxu0 0.0
          %739 = vmatprep.subr.mxu0 0.0
          %740 = vmatpush1.msra.mxu0 0.0
          %741 = vmatprep.subr.mxu0 0.0
          %742 = vmatpush1.msra.mxu0 0.0
          %743 = vmatprep.subr.mxu0 0.0
          %744 = vmatpush1.msra.mxu0 0.0
          %745 = vmatprep.subr.mxu0 0.0
          %746 = vmatpush1.msra.mxu0 0.0
          %747 = vmatprep.mubr.f32.mxu0 0.0
          %748 = vmatmul.mubr.f32.gmra.mrb[0].mxu0 %v675
          %v749 = vpop.f32.mrb[0].mxu0
          %v750 = vadd.f32 %v672, %v749
          %v751 = vpop.f32.mrb[0].mxu0
          %752 = vmatprep.mubr.f32.mxu0 0.0
          %753 = vmatmul.mubr.f32.gmra.mrb[0].mxu0 %v678
          %v754 = vpop.f32.mrb[0].mxu0
          %v755 = vadd.f32 %v672, %v754
          %v756 = vpop.f32.mrb[0].mxu0
          %757 = vdwg.mxu0
          %vm758 = vcmask 105472
          %759 = vst.msk [vmem:[%s401] sm:$0xff] %vm758, %v750
          %760 = vst.msk [vmem:[%s401 + $0x8] sm:$0xff] %vm758, %v755
        $region108: #{mlp_forward.1} parent=95 // pred_fallthru
          _
        %s761 = sand.u32 %s192, 1
        %s762 = sand.u32 %s192, 1
        %s763 = smul.addr %s762, 16
        %s764 = scalar_lea.vmem [#allocation4], %s763
        // Predicated region
        $region109: #{mlp_forward.1} parent=95 // pred_check
          %p765 = pneg %p202
        $region110: #{mlp_forward.1} parent=95 // pred_check_branch
          %767 = sbr.rel (%p765) target = $region112
        $region111: #{mlp_forward.1} parent=95 // pred_region
          %s768 = smul.u32 2, %s22
          %s769 = ssub.s32 3, %s768
          %p770 = scmp.lt.s32.totalorder %s769, 2
          %s771 = scalar_select %p770, %s769, 2
          %s772 = smul.u32 128, %s771
          %p773 = scmp.ne.s32.totalorder 0, %s772
          %s774 = smul.addr %s768, 8
          %s775 = scalar_lea.vmem %s7, %s774
          // Predicated region
          $region113: #{mlp_forward.1} parent=111 // pred_check
            %p776 = pneg %p773
          $region114: #{mlp_forward.1} parent=111 // pred_check_branch
            %778 = sbr.rel (%p776) target = $region116
          $region115: #{mlp_forward.1} parent=111 // pred_region
            // Predicated region
            $region117: #{mlp_forward.1} parent=115 // pred_check
              _
            $region118: #{mlp_forward.1} parent=115 // pred_check_branch
              %780 = sbr.rel (0) target = $region120
            $region119: #{mlp_forward.1} parent=115 // pred_region
              // Predicated region
              $region139: #{mlp_forward.1} parent=119 // pred_check
                _
              $region140: #{mlp_forward.1} parent=119 // pred_check_branch
                %831 = sbr.rel (0) target = $region142
              $region141: #{mlp_forward.1} parent=119 // pred_region
                %s832 = sshrl.u32 %s771, 1
                // While loop
                $region143: #{mlp_forward.1} parent=141 // loop_pre_header
                  _
                $region144: #{mlp_forward.1} parent=141 // loop_header
                  %s834 = sphi 0, %s836
                  %p835 = scmp.ge.s32.totalorder %s834, %s832
                  %s839 = sphi 0, %s848
                  %s840 = sphi %s764, %s851
                  %s841 = sphi %s775, %s852
                $region145: #{mlp_forward.1} parent=141 // loop_header_branch
                  %838 = sbr.rel (%p835) target = $region149
                $region146: #{mlp_forward.1} parent=141 // loop_body
                  %v842 = vld [vmem:[%s840] sm:$0xff]
                  %843 = vst [vmem:[%s841] sm:$0xff] %v842
                  %v844 = vld [vmem:[%s840 + $0x8] sm:$0xff]
                  %845 = vst [vmem:[%s841 + $0x8] sm:$0xff] %v844
                  %s846 = sadd.s32 1, %s839
                  %p847 = scmp.ge.s32.totalorder %s846, %s832
                  %s848 = scalar_select %p847, 0, %s846
                  %s849 = smul.u32 %s848, 16
                  %s850 = smul.u32 %s848, 16
                  %s851 = scalar_lea.vmem %s764, %s849 [#allocation4]
                  %s852 = scalar_lea.vmem %s775, %s850
                $region147: #{mlp_forward.1} parent=141 // loop_footer
                  %s836 = sadd.s32 %s834, 1
                $region148: #{mlp_forward.1} parent=141 // loop_footer_branch
                  %833 = sbr.rel target = $region144
                $region149: #{mlp_forward.1} parent=141 // loop_exit
                  _
                %s853 = sshrl.u32 %s771, 1
                %s854 = sand.u32 %s771, 1
                %s855 = smul.u32 %s853, 2
                %s856 = smul.u32 8, %s855
                %s857 = scalar_lea.vmem %s764, %s856 [#allocation4]
                %s858 = smul.u32 8, %s855
                %s859 = scalar_lea.vmem %s775, %s858
                // While loop
                $region150: #{mlp_forward.1} parent=141 // loop_pre_header
                  _
                $region151: #{mlp_forward.1} parent=141 // loop_header
                  %s861 = sphi 0, %s863
                  %p862 = scmp.ge.s32.totalorder %s861, %s854
                  %s866 = sphi 0, %s873
                  %s867 = sphi %s857, %s876
                  %s868 = sphi %s859, %s877
                $region152: #{mlp_forward.1} parent=141 // loop_header_branch
                  %865 = sbr.rel (%p862) target = $region156
                $region153: #{mlp_forward.1} parent=141 // loop_body
                  %v869 = vld [vmem:[%s867] sm:$0xff]
                  %870 = vst [vmem:[%s868] sm:$0xff] %v869
                  %s871 = sadd.s32 1, %s866
                  %p872 = scmp.ge.s32.totalorder %s871, %s854
                  %s873 = scalar_select %p872, 0, %s871
                  %s874 = smul.u32 %s873, 8
                  %s875 = smul.u32 %s873, 8
                  %s876 = scalar_lea.vmem %s857, %s874 [#allocation4]
                  %s877 = scalar_lea.vmem %s859, %s875
                $region154: #{mlp_forward.1} parent=141 // loop_footer
                  %s863 = sadd.s32 %s861, 1
                $region155: #{mlp_forward.1} parent=141 // loop_footer_branch
                  %860 = sbr.rel target = $region151
                $region156: #{mlp_forward.1} parent=141 // loop_exit
                  _
              $region142: #{mlp_forward.1} parent=119 // pred_fallthru
                _
              // Predicated region
              $region157: #{mlp_forward.1} parent=119 // pred_check
                _
              $region158: #{mlp_forward.1} parent=119 // pred_check_branch
                %879 = sbr.rel target = $region160
              $region159: #{mlp_forward.1} parent=119 // pred_region
                _
              $region160: #{mlp_forward.1} parent=119 // pred_fallthru
                _
            $region120: #{mlp_forward.1} parent=115 // pred_fallthru
              _
            // Predicated region
            $region121: #{mlp_forward.1} parent=115 // pred_check
              _
            $region122: #{mlp_forward.1} parent=115 // pred_check_branch
              %782 = sbr.rel target = $region124
            $region123: #{mlp_forward.1} parent=115 // pred_region
              %s784 = sshrl.u32 %s771, 1
              // While loop
              $region125: #{mlp_forward.1} parent=123 // loop_pre_header
                _
              $region126: #{mlp_forward.1} parent=123 // loop_header
                %s786 = sphi 0, %s788
                %p787 = scmp.ge.s32.totalorder %s786, %s784
                %s791 = sphi 0, %s800
                %s792 = sphi %s764, %s803
                %s793 = sphi %s775, %s804
              $region127: #{mlp_forward.1} parent=123 // loop_header_branch
                %790 = sbr.rel (%p787) target = $region131
              $region128: #{mlp_forward.1} parent=123 // loop_body
                %v794 = vld [vmem:[%s792] sm:$0xff]
                %795 = vst [vmem:[%s793] sm:$0xff] %v794
                %v796 = vld [vmem:[%s792 + $0x8] sm:$0xff]
                %797 = vst [vmem:[%s793 + $0x8] sm:$0xff] %v796
                %s798 = sadd.s32 1, %s791
                %p799 = scmp.ge.s32.totalorder %s798, %s784
                %s800 = scalar_select %p799, 0, %s798
                %s801 = smul.u32 %s800, 16
                %s802 = smul.u32 %s800, 16
                %s803 = scalar_lea.vmem %s764, %s801 [#allocation4]
                %s804 = scalar_lea.vmem %s775, %s802
              $region129: #{mlp_forward.1} parent=123 // loop_footer
                %s788 = sadd.s32 %s786, 1
              $region130: #{mlp_forward.1} parent=123 // loop_footer_branch
                %785 = sbr.rel target = $region126
              $region131: #{mlp_forward.1} parent=123 // loop_exit
                _
              %s805 = sshrl.u32 %s771, 1
              %s806 = sand.u32 %s771, 1
              %s807 = smul.u32 %s805, 2
              %s808 = smul.u32 8, %s807
              %s809 = scalar_lea.vmem %s764, %s808 [#allocation4]
              %s810 = smul.u32 8, %s807
              %s811 = scalar_lea.vmem %s775, %s810
              // While loop
              $region132: #{mlp_forward.1} parent=123 // loop_pre_header
                _
              $region133: #{mlp_forward.1} parent=123 // loop_header
                %s813 = sphi 0, %s815
                %p814 = scmp.ge.s32.totalorder %s813, %s806
                %s818 = sphi 0, %s825
                %s819 = sphi %s809, %s828
                %s820 = sphi %s811, %s829
              $region134: #{mlp_forward.1} parent=123 // loop_header_branch
                %817 = sbr.rel (%p814) target = $region138
              $region135: #{mlp_forward.1} parent=123 // loop_body
                %v821 = vld [vmem:[%s819] sm:$0xff]
                %822 = vst [vmem:[%s820] sm:$0xff] %v821
                %s823 = sadd.s32 1, %s818
                %p824 = scmp.ge.s32.totalorder %s823, %s806
                %s825 = scalar_select %p824, 0, %s823
                %s826 = smul.u32 %s825, 8
                %s827 = smul.u32 %s825, 8
                %s828 = scalar_lea.vmem %s809, %s826 [#allocation4]
                %s829 = scalar_lea.vmem %s811, %s827
              $region136: #{mlp_forward.1} parent=123 // loop_footer
                %s815 = sadd.s32 %s813, 1
              $region137: #{mlp_forward.1} parent=123 // loop_footer_branch
                %812 = sbr.rel target = $region133
              $region138: #{mlp_forward.1} parent=123 // loop_exit
                _
            $region124: #{mlp_forward.1} parent=115 // pred_fallthru
              _
          $region116: #{mlp_forward.1} parent=111 // pred_fallthru
            _
          %880 = vnop
        $region112: #{mlp_forward.1} parent=95 // pred_fallthru
          _
      $region96: #{mlp_forward.1} parent=5 // pred_fallthru
        _
      %p881 = scmp.le.s32.totalorder 2, %s13
      // Predicated region
      $region161: #{mlp_forward.1} parent=5 // pred_check
        %p882 = pneg %p881
      $region162: #{mlp_forward.1} parent=5 // pred_check_branch
        %884 = sbr.rel (%p882) target = $region164
      $region163: #{mlp_forward.1} parent=5 // pred_region
        %s885 = ssub.s32 %s13, 2
        // Predicated region
        $region165: #{mlp_forward.1} parent=163 // pred_check
          %p886 = pneg %p208
        $region166: #{mlp_forward.1} parent=163 // pred_check_branch
          %888 = sbr.rel (%p886) target = $region168
        $region167: #{mlp_forward.1} parent=163 // pred_region
          %s889 = sand.u32 %s193, 1
          %s890 = sand.u32 %s193, 1
          %s891 = smul.addr %s890, 16
          %s892 = scalar_lea.vmem [#allocation4], %s891
        $region168: #{mlp_forward.1} parent=163 // pred_fallthru
          _
      $region164: #{mlp_forward.1} parent=5 // pred_fallthru
        _
    $region6: #{mlp_forward.1} parent=1 // loop_footer
      %s17 = sadd.s32 1, %s13
    $region7: #{mlp_forward.1} parent=1 // loop_footer_branch
      %12 = sbr.rel target = $region3
    $region8: #{mlp_forward.1} parent=1 // loop_exit
      _

</llo_original>
